<compile_context>
chip_gen: v5e
topology: v5e:2x2
jax: 0.10.0
libtpu: 0.0.40
codegen_flags: <defaults>
</compile_context>

<pallas_src>
import functools

import jax
import jax.numpy as jnp
from jax.experimental import pallas as pl
from jax.experimental.pallas import tpu as pltpu

NUM_HEADS = 4
EPS = 1e-5


def _dot(a, b, contract_a=1, contract_b=0):
    """2-D matmul on the MXU with f32 accumulation (no batch dims)."""
    return jax.lax.dot_general(
        a, b,
        dimension_numbers=(((contract_a,), (contract_b,)), ((), ())),
        preferred_element_type=jnp.float32)


def encoder_stack_kernel(x_ref, wqkv_ref, wo_ref, bqkv_ref, bo_ref, out_ref, *,
                         num_layers, num_heads):
    # x_ref block: (1, S, D)
    S = x_ref.shape[1]
    D = x_ref.shape[2]
    H = num_heads
    hd = D // H

    # Shared weights: loaded once from VMEM, reused by all layers & grid steps.
    wqkv = wqkv_ref[...].astype(jnp.float32)   # (D, 3D)  [Q|K|V], scale folded
    wo = wo_ref[...].astype(jnp.float32)       # (D, D)
    bqkv = bqkv_ref[...].astype(jnp.float32)   # (1, 3D)
    bo = bo_ref[...].astype(jnp.float32)       # (1, D)

    def layer(_, x):                           # x: (S, D) f32
        # --- fused dense QKV projection: one MXU call, N = 3*D lanes -----
        qkv = _dot(x, wqkv) + bqkv             # (S, 3D)
        q = qkv[:, :D]                         # D-aligned slices
        k = qkv[:, D:2 * D]
        v = qkv[:, 2 * D:]

        # --- per-head scaled dot-product attention (heads only here) -----
        ctx_heads = []
        for h in range(H):                     # H small 2-D matmuls per side
            lo, hi = h * hd, (h + 1) * hd
            q_h = q[:, lo:hi]                  # (S, hd); scale pre-folded
            k_h = k[:, lo:hi]
            v_h = v[:, lo:hi]
            s = _dot(q_h, k_h, 1, 1)           # (S, S) = q_h @ k_h.T
            s = s - jnp.max(s, axis=-1, keepdims=True)
            p = jnp.exp(s)
            p = p * pl.reciprocal(jnp.sum(p, axis=-1, keepdims=True),
                                  approx=True)
            ctx_heads.append(_dot(p, v_h))     # (S, hd)
        ctx = jnp.concatenate(ctx_heads, axis=1)          # (S, D), head-major

        # --- dense output projection: one (S,D)@(D,D) MXU call -----------
        attn_out = _dot(ctx, wo) + bo                     # (S, D)

        # --- residual + InstanceNorm1d over seq axis + ReLU ---------------
        y = x + attn_out
        mean = jnp.mean(y, axis=0, keepdims=True)
        var = jnp.mean((y - mean) ** 2, axis=0, keepdims=True)
        return jnp.maximum((y - mean) * jax.lax.rsqrt(var + EPS), 0.0)

    x0 = x_ref[0].astype(jnp.float32)          # (S, D)
    out_ref[0] = jax.lax.fori_loop(0, num_layers, layer, x0).astype(out_ref.dtype)


def transformer_encoder_forward(src, params, num_encoder_layers=6,
                                num_heads=NUM_HEADS):
    """src: (seq, batch, d_model), like the PyTorch module. Returns same shape."""
    S, B, D = src.shape
    H = num_heads
    hd = D // H
    wq, wk, wv, wo, bq, bk, bv, bo = params     # math convention: W is (in, out)
    scale = 1.0 / float(hd) ** 0.5

    # Fuse Q/K/V weights into one (D, 3D) operand ordered [Q|K|V] and fold the
    # 1/sqrt(hd) softmax scale into the Q columns (one-time tiny XLA ops).
    wqkv = jnp.concatenate([wq * scale, wk, wv], axis=1)        # (D, 3D)
    bqkv = jnp.concatenate([bq * scale, bk, bv], axis=1)        # (1, 3D)
    bo2 = bo.reshape(1, D)

    # (S,B,D) <-> (B,S,D): two tiny XLA transposes outside the kernel.  For the
    # real d_model=512 the (1,S,D) I/O blocks are already lane-dense (D % 128
    # == 0); only this toy D=32 shape uses partial lanes.
    x = jnp.transpose(src, (1, 0, 2))           # (B, S, D)

    kernel = functools.partial(encoder_stack_kernel,
                               num_layers=num_encoder_layers,
                               num_heads=H)

    out = pl.pallas_call(
        kernel,
        out_shape=jax.ShapeDtypeStruct((B, S, D), src.dtype),
        grid_spec=pltpu.PrefetchScalarGridSpec(
            num_scalar_prefetch=0,
            grid=(B,),
            in_specs=[
                pl.BlockSpec((1, S, D), lambda b: (b, 0, 0)),
                pl.BlockSpec((D, 3 * D), lambda b: (0, 0)),
                pl.BlockSpec((D, D), lambda b: (0, 0)),
                pl.BlockSpec((1, 3 * D), lambda b: (0, 0)),
                pl.BlockSpec((1, D), lambda b: (0, 0)),
            ],
            out_specs=pl.BlockSpec((1, S, D), lambda b: (b, 0, 0)),
        ),
        compiler_params=pltpu.CompilerParams(
            dimension_semantics=("parallel",),
        ),
    )(x, wqkv, wo, bqkv, bo2)

    return jnp.transpose(out, (1, 0, 2))        # (S, B, D)


def init_params(key, d_model):
    keys = jax.random.split(key, 4)
    sc = 1.0 / (d_model ** 0.5)
    wq = jax.random.normal(keys[0], (d_model, d_model), jnp.float32) * sc
    wk = jax.random.normal(keys[1], (d_model, d_model), jnp.float32) * sc
    wv = jax.random.normal(keys[2], (d_model, d_model), jnp.float32) * sc
    wo = jax.random.normal(keys[3], (d_model, d_model), jnp.float32) * sc
    bq = jnp.zeros((1, d_model), jnp.float32)
    bk = jnp.zeros((1, d_model), jnp.float32)
    bv = jnp.zeros((1, d_model), jnp.float32)
    bo = jnp.zeros((1, d_model), jnp.float32)
    return (wq, wk, wv, wo, bq, bk, bv, bo)


if __name__ == "__main__":
    seq, batch, d_model = 8, 2, 32
    num_encoder_layers = 6

    key = jax.random.PRNGKey(0)
    k_src, k_par = jax.random.split(key)
    src = jax.random.normal(k_src, (seq, batch, d_model), jnp.float32)
    params = init_params(k_par, d_model)

    out = transformer_encoder_forward(src, params,
                                      num_encoder_layers=num_encoder_layers)
    out = jax.block_until_ready(out)
    assert out.shape == (seq, batch, d_model)
    assert bool(jnp.all(jnp.isfinite(out)))
    print("KERNEL_OK")
</pallas_src>

<mosaic_0001>
module attributes {stable_mosaic.version = 11 : i64} {
  func.func @encoder_stack_kernel(%arg0: i32, %arg1: memref<1x8x32xf32, #tpu.memory_space<vmem>>, %arg2: memref<32x96xf32, #tpu.memory_space<vmem>>, %arg3: memref<32x32xf32, #tpu.memory_space<vmem>>, %arg4: memref<1x96xf32, #tpu.memory_space<vmem>>, %arg5: memref<1x32xf32, #tpu.memory_space<vmem>>, %arg6: memref<1x8x32xf32, #tpu.memory_space<vmem>>) attributes {dimension_semantics = [#tpu.dimension_semantics<parallel>], iteration_bounds = array<i64: 2>, scalar_prefetch = 0 : i64, scratch_operands = 0 : i64, tpu.core_type = #tpu.core_type<tc>, window_params = [{transform_indices = @transform_0, window_bounds = array<i64: 1, 8, 32>}, {pipeline_mode = #tpu.pipeline_mode<synchronous>, transform_indices = @transform_1, window_bounds = array<i64: 32, 96>}, {pipeline_mode = #tpu.pipeline_mode<synchronous>, transform_indices = @transform_2, window_bounds = array<i64: 32, 32>}, {pipeline_mode = #tpu.pipeline_mode<synchronous>, transform_indices = @transform_3, window_bounds = array<i64: 1, 96>}, {pipeline_mode = #tpu.pipeline_mode<synchronous>, transform_indices = @transform_4, window_bounds = array<i64: 1, 32>}, {transform_indices = @transform_5, window_bounds = array<i64: 1, 8, 32>}]} {
    %c0 = arith.constant 0 : index
    %c0_0 = arith.constant 0 : index
    %0 = vector.load %arg2[%c0, %c0_0] : memref<32x96xf32, #tpu.memory_space<vmem>>, vector<32x96xf32>
    %c0_1 = arith.constant 0 : index
    %c0_2 = arith.constant 0 : index
    %1 = vector.load %arg3[%c0_1, %c0_2] : memref<32x32xf32, #tpu.memory_space<vmem>>, vector<32x32xf32>
    %c0_3 = arith.constant 0 : index
    %c0_4 = arith.constant 0 : index
    %2 = vector.load %arg4[%c0_3, %c0_4] : memref<1x96xf32, #tpu.memory_space<vmem>>, vector<1x96xf32>
    %c0_5 = arith.constant 0 : index
    %c0_6 = arith.constant 0 : index
    %3 = vector.load %arg5[%c0_5, %c0_6] : memref<1x32xf32, #tpu.memory_space<vmem>>, vector<1x32xf32>
    %c0_7 = arith.constant 0 : index
    %c0_8 = arith.constant 0 : index
    %c0_9 = arith.constant 0 : index
    %4 = vector.load %arg1[%c0_7, %c0_8, %c0_9] : memref<1x8x32xf32, #tpu.memory_space<vmem>>, vector<1x8x32xf32>
    %5 = vector.shape_cast %4 : vector<1x8x32xf32> to vector<8x32xf32>
    %c0_i32 = arith.constant 0 : i32
    %c6_i32 = arith.constant 6 : i32
    %6 = arith.addi %c0_i32, %c6_i32 : i32
    %c1_i32 = arith.constant 1 : i32
    %7 = scf.for %arg7 = %c0_i32 to %6 step %c1_i32 iter_args(%arg8 = %5) -> (vector<8x32xf32>)  : i32 {
      %cst = arith.constant dense<0.000000e+00> : vector<8x96xf32>
      %11 = tpu.matmul %arg8, %0, %cst {dimension_numbers = #tpu.dot_dimension_numbers<[1], [0], [0], [1], [0, 0, 1, 1], [], []>} : vector<8x32xf32>, vector<32x96xf32>, vector<8x96xf32> -> vector<8x96xf32>
      %12 = vector.broadcast %2 : vector<1x96xf32> to vector<8x96xf32>
      %13 = arith.addf %11, %12 : vector<8x96xf32>
      %14 = vector.extract_strided_slice %13 {offsets = [0, 0], sizes = [8, 32], strides = [1, 1]} : vector<8x96xf32> to vector<8x32xf32>
      %15 = vector.extract_strided_slice %13 {offsets = [0, 32], sizes = [8, 32], strides = [1, 1]} : vector<8x96xf32> to vector<8x32xf32>
      %16 = vector.extract_strided_slice %13 {offsets = [0, 64], sizes = [8, 32], strides = [1, 1]} : vector<8x96xf32> to vector<8x32xf32>
      %17 = vector.extract_strided_slice %14 {offsets = [0, 0], sizes = [8, 8], strides = [1, 1]} : vector<8x32xf32> to vector<8x8xf32>
      %18 = vector.extract_strided_slice %15 {offsets = [0, 0], sizes = [8, 8], strides = [1, 1]} : vector<8x32xf32> to vector<8x8xf32>
      %19 = vector.extract_strided_slice %16 {offsets = [0, 0], sizes = [8, 8], strides = [1, 1]} : vector<8x32xf32> to vector<8x8xf32>
      %cst_13 = arith.constant dense<0.000000e+00> : vector<8x8xf32>
      %20 = tpu.matmul %17, %18, %cst_13 {dimension_numbers = #tpu.dot_dimension_numbers<[1], [1], [0], [0], [0, 0, 1, 0], [], []>} : vector<8x8xf32>, vector<8x8xf32>, vector<8x8xf32> -> vector<8x8xf32>
      %cst_14 = arith.constant dense<0xFF800000> : vector<8xf32>
      %21 = vector.multi_reduction <maximumf>, %20, %cst_14 [1] : vector<8x8xf32> to vector<8xf32>
      %22 = vector.shape_cast %21 : vector<8xf32> to vector<8x1xf32>
      %23 = vector.broadcast %22 : vector<8x1xf32> to vector<8x8xf32>
      %24 = arith.subf %20, %23 : vector<8x8xf32>
      %25 = math.exp %24 : vector<8x8xf32>
      %cst_15 = arith.constant dense<0.000000e+00> : vector<8xf32>
      %26 = vector.multi_reduction <add>, %25, %cst_15 [1] : vector<8x8xf32> to vector<8xf32>
      %27 = vector.shape_cast %26 : vector<8xf32> to vector<8x1xf32>
      %28 = tpu.reciprocal %27 {approx = true} : vector<8x1xf32> -> vector<8x1xf32>
      %29 = vector.broadcast %28 : vector<8x1xf32> to vector<8x8xf32>
      %30 = arith.mulf %25, %29 : vector<8x8xf32>
      %cst_16 = arith.constant dense<0.000000e+00> : vector<8x8xf32>
      %31 = tpu.matmul %30, %19, %cst_16 {dimension_numbers = #tpu.dot_dimension_numbers<[1], [0], [0], [1], [0, 0, 1, 1], [], []>} : vector<8x8xf32>, vector<8x8xf32>, vector<8x8xf32> -> vector<8x8xf32>
      %32 = vector.extract_strided_slice %14 {offsets = [0, 8], sizes = [8, 8], strides = [1, 1]} : vector<8x32xf32> to vector<8x8xf32>
      %33 = vector.extract_strided_slice %15 {offsets = [0, 8], sizes = [8, 8], strides = [1, 1]} : vector<8x32xf32> to vector<8x8xf32>
      %34 = vector.extract_strided_slice %16 {offsets = [0, 8], sizes = [8, 8], strides = [1, 1]} : vector<8x32xf32> to vector<8x8xf32>
      %cst_17 = arith.constant dense<0.000000e+00> : vector<8x8xf32>
      %35 = tpu.matmul %32, %33, %cst_17 {dimension_numbers = #tpu.dot_dimension_numbers<[1], [1], [0], [0], [0, 0, 1, 0], [], []>} : vector<8x8xf32>, vector<8x8xf32>, vector<8x8xf32> -> vector<8x8xf32>
      %cst_18 = arith.constant dense<0xFF800000> : vector<8xf32>
      %36 = vector.multi_reduction <maximumf>, %35, %cst_18 [1] : vector<8x8xf32> to vector<8xf32>
      %37 = vector.shape_cast %36 : vector<8xf32> to vector<8x1xf32>
      %38 = vector.broadcast %37 : vector<8x1xf32> to vector<8x8xf32>
      %39 = arith.subf %35, %38 : vector<8x8xf32>
      %40 = math.exp %39 : vector<8x8xf32>
      %cst_19 = arith.constant dense<0.000000e+00> : vector<8xf32>
      %41 = vector.multi_reduction <add>, %40, %cst_19 [1] : vector<8x8xf32> to vector<8xf32>
      %42 = vector.shape_cast %41 : vector<8xf32> to vector<8x1xf32>
      %43 = tpu.reciprocal %42 {approx = true} : vector<8x1xf32> -> vector<8x1xf32>
      %44 = vector.broadcast %43 : vector<8x1xf32> to vector<8x8xf32>
      %45 = arith.mulf %40, %44 : vector<8x8xf32>
      %cst_20 = arith.constant dense<0.000000e+00> : vector<8x8xf32>
      %46 = tpu.matmul %45, %34, %cst_20 {dimension_numbers = #tpu.dot_dimension_numbers<[1], [0], [0], [1], [0, 0, 1, 1], [], []>} : vector<8x8xf32>, vector<8x8xf32>, vector<8x8xf32> -> vector<8x8xf32>
      %47 = vector.extract_strided_slice %14 {offsets = [0, 16], sizes = [8, 8], strides = [1, 1]} : vector<8x32xf32> to vector<8x8xf32>
      %48 = vector.extract_strided_slice %15 {offsets = [0, 16], sizes = [8, 8], strides = [1, 1]} : vector<8x32xf32> to vector<8x8xf32>
      %49 = vector.extract_strided_slice %16 {offsets = [0, 16], sizes = [8, 8], strides = [1, 1]} : vector<8x32xf32> to vector<8x8xf32>
      %cst_21 = arith.constant dense<0.000000e+00> : vector<8x8xf32>
      %50 = tpu.matmul %47, %48, %cst_21 {dimension_numbers = #tpu.dot_dimension_numbers<[1], [1], [0], [0], [0, 0, 1, 0], [], []>} : vector<8x8xf32>, vector<8x8xf32>, vector<8x8xf32> -> vector<8x8xf32>
      %cst_22 = arith.constant dense<0xFF800000> : vector<8xf32>
      %51 = vector.multi_reduction <maximumf>, %50, %cst_22 [1] : vector<8x8xf32> to vector<8xf32>
      %52 = vector.shape_cast %51 : vector<8xf32> to vector<8x1xf32>
      %53 = vector.broadcast %52 : vector<8x1xf32> to vector<8x8xf32>
      %54 = arith.subf %50, %53 : vector<8x8xf32>
      %55 = math.exp %54 : vector<8x8xf32>
      %cst_23 = arith.constant dense<0.000000e+00> : vector<8xf32>
      %56 = vector.multi_reduction <add>, %55, %cst_23 [1] : vector<8x8xf32> to vector<8xf32>
      %57 = vector.shape_cast %56 : vector<8xf32> to vector<8x1xf32>
      %58 = tpu.reciprocal %57 {approx = true} : vector<8x1xf32> -> vector<8x1xf32>
      %59 = vector.broadcast %58 : vector<8x1xf32> to vector<8x8xf32>
      %60 = arith.mulf %55, %59 : vector<8x8xf32>
      %cst_24 = arith.constant dense<0.000000e+00> : vector<8x8xf32>
      %61 = tpu.matmul %60, %49, %cst_24 {dimension_numbers = #tpu.dot_dimension_numbers<[1], [0], [0], [1], [0, 0, 1, 1], [], []>} : vector<8x8xf32>, vector<8x8xf32>, vector<8x8xf32> -> vector<8x8xf32>
      %62 = vector.extract_strided_slice %14 {offsets = [0, 24], sizes = [8, 8], strides = [1, 1]} : vector<8x32xf32> to vector<8x8xf32>
      %63 = vector.extract_strided_slice %15 {offsets = [0, 24], sizes = [8, 8], strides = [1, 1]} : vector<8x32xf32> to vector<8x8xf32>
      %64 = vector.extract_strided_slice %16 {offsets = [0, 24], sizes = [8, 8], strides = [1, 1]} : vector<8x32xf32> to vector<8x8xf32>
      %cst_25 = arith.constant dense<0.000000e+00> : vector<8x8xf32>
      %65 = tpu.matmul %62, %63, %cst_25 {dimension_numbers = #tpu.dot_dimension_numbers<[1], [1], [0], [0], [0, 0, 1, 0], [], []>} : vector<8x8xf32>, vector<8x8xf32>, vector<8x8xf32> -> vector<8x8xf32>
      %cst_26 = arith.constant dense<0xFF800000> : vector<8xf32>
      %66 = vector.multi_reduction <maximumf>, %65, %cst_26 [1] : vector<8x8xf32> to vector<8xf32>
      %67 = vector.shape_cast %66 : vector<8xf32> to vector<8x1xf32>
      %68 = vector.broadcast %67 : vector<8x1xf32> to vector<8x8xf32>
      %69 = arith.subf %65, %68 : vector<8x8xf32>
      %70 = math.exp %69 : vector<8x8xf32>
      %cst_27 = arith.constant dense<0.000000e+00> : vector<8xf32>
      %71 = vector.multi_reduction <add>, %70, %cst_27 [1] : vector<8x8xf32> to vector<8xf32>
      %72 = vector.shape_cast %71 : vector<8xf32> to vector<8x1xf32>
      %73 = tpu.reciprocal %72 {approx = true} : vector<8x1xf32> -> vector<8x1xf32>
      %74 = vector.broadcast %73 : vector<8x1xf32> to vector<8x8xf32>
      %75 = arith.mulf %70, %74 : vector<8x8xf32>
      %cst_28 = arith.constant dense<0.000000e+00> : vector<8x8xf32>
      %76 = tpu.matmul %75, %64, %cst_28 {dimension_numbers = #tpu.dot_dimension_numbers<[1], [0], [0], [1], [0, 0, 1, 1], [], []>} : vector<8x8xf32>, vector<8x8xf32>, vector<8x8xf32> -> vector<8x8xf32>
      %77 = tpu.concatenate %31, %46, %61, %76 in 1 : vector<8x8xf32>, vector<8x8xf32>, vector<8x8xf32>, vector<8x8xf32> -> vector<8x32xf32>
      %cst_29 = arith.constant dense<0.000000e+00> : vector<8x32xf32>
      %78 = tpu.matmul %77, %1, %cst_29 {dimension_numbers = #tpu.dot_dimension_numbers<[1], [0], [0], [1], [0, 0, 1, 1], [], []>} : vector<8x32xf32>, vector<32x32xf32>, vector<8x32xf32> -> vector<8x32xf32>
      %79 = vector.broadcast %3 : vector<1x32xf32> to vector<8x32xf32>
      %80 = arith.addf %78, %79 : vector<8x32xf32>
      %81 = arith.addf %arg8, %80 : vector<8x32xf32>
      %cst_30 = arith.constant dense<0.000000e+00> : vector<32xf32>
      %82 = vector.multi_reduction <add>, %81, %cst_30 [0] : vector<8x32xf32> to vector<32xf32>
      %83 = vector.shape_cast %82 : vector<32xf32> to vector<1x32xf32>
      %cst_31 = arith.constant 8.000000e+00 : f32
      %84 = vector.broadcast %cst_31 : f32 to vector<1x32xf32>
      %85 = arith.divf %83, %84 : vector<1x32xf32>
      %86 = vector.broadcast %85 : vector<1x32xf32> to vector<8x32xf32>
      %87 = arith.subf %81, %86 : vector<8x32xf32>
      %88 = arith.mulf %87, %87 : vector<8x32xf32>
      %cst_32 = arith.constant dense<0.000000e+00> : vector<32xf32>
      %89 = vector.multi_reduction <add>, %88, %cst_32 [0] : vector<8x32xf32> to vector<32xf32>
      %90 = vector.shape_cast %89 : vector<32xf32> to vector<1x32xf32>
      %cst_33 = arith.constant 8.000000e+00 : f32
      %91 = vector.broadcast %cst_33 : f32 to vector<1x32xf32>
      %92 = arith.divf %90, %91 : vector<1x32xf32>
      %93 = vector.broadcast %85 : vector<1x32xf32> to vector<8x32xf32>
      %94 = arith.subf %81, %93 : vector<8x32xf32>
      %cst_34 = arith.constant 9.99999974E-6 : f32
      %95 = vector.broadcast %cst_34 : f32 to vector<1x32xf32>
      %96 = arith.addf %92, %95 : vector<1x32xf32>
      %97 = math.rsqrt %96 : vector<1x32xf32>
      %98 = vector.broadcast %97 : vector<1x32xf32> to vector<8x32xf32>
      %99 = arith.mulf %94, %98 : vector<8x32xf32>
      %cst_35 = arith.constant 0.000000e+00 : f32
      %100 = vector.broadcast %cst_35 : f32 to vector<8x32xf32>
      %101 = arith.maximumf %99, %100 : vector<8x32xf32>
      scf.yield %101 : vector<8x32xf32>
    }
    %c0_10 = arith.constant 0 : index
    %c0_11 = arith.constant 0 : index
    %c0_12 = arith.constant 0 : index
    %8 = vector.load %arg6[%c0_10, %c0_11, %c0_12] : memref<1x8x32xf32, #tpu.memory_space<vmem>>, vector<1x8x32xf32>
    %9 = vector.shape_cast %8 : vector<1x8x32xf32> to vector<8x32xf32>
    %10 = vector.shape_cast %7 : vector<8x32xf32> to vector<1x8x32xf32>
    tpu.vector_store %arg6[%c0_10, %c0_11, %c0_12], %10 {strides = array<i32>} : memref<1x8x32xf32, #tpu.memory_space<vmem>>, vector<1x8x32xf32>,
    return
  }
  func.func @transform_0(%arg0: i32) -> (i32, i32, i32) {
    %c0_i32 = arith.constant 0 : i32
    %c0_i32_0 = arith.constant 0 : i32
    %c0_i32_1 = arith.constant 0 : i32
    return %arg0, %c0_i32, %c0_i32_0 : i32, i32, i32
  }
  func.func @transform_1(%arg0: i32) -> (i32, i32) {
    %c0_i32 = arith.constant 0 : i32
    %c0_i32_0 = arith.constant 0 : i32
    %c0_i32_1 = arith.constant 0 : i32
    return %c0_i32, %c0_i32_0 : i32, i32
  }
  func.func @transform_2(%arg0: i32) -> (i32, i32) {
    %c0_i32 = arith.constant 0 : i32
    %c0_i32_0 = arith.constant 0 : i32
    %c0_i32_1 = arith.constant 0 : i32
    return %c0_i32, %c0_i32_0 : i32, i32
  }
  func.func @transform_3(%arg0: i32) -> (i32, i32) {
    %c0_i32 = arith.constant 0 : i32
    %c0_i32_0 = arith.constant 0 : i32
    %c0_i32_1 = arith.constant 0 : i32
    return %c0_i32, %c0_i32_0 : i32, i32
  }
  func.func @transform_4(%arg0: i32) -> (i32, i32) {
    %c0_i32 = arith.constant 0 : i32
    %c0_i32_0 = arith.constant 0 : i32
    %c0_i32_1 = arith.constant 0 : i32
    return %c0_i32, %c0_i32_0 : i32, i32
  }
  func.func @transform_5(%arg0: i32) -> (i32, i32, i32) {
    %c0_i32 = arith.constant 0 : i32
    %c0_i32_0 = arith.constant 0 : i32
    %c0_i32_1 = arith.constant 0 : i32
    return %arg0, %c0_i32, %c0_i32_0 : i32, i32, i32
  }
}

</mosaic_0001>

<llo_original>
// kernel: tpu_custom_call.1
$region0: #{tpu_custom_call.1}
  #allocation0 [shape = 'u32[]', space=smem, size = 0x4, offset = 0x4, fixed_abs, tag = 'smem constant byte address 0x4 - core index']
  #allocation1 [shape = 'u32[72,128]{1,0:T(1,128)}', space=vmem, size = 0x9000, scoped, tag = 'internal scratch']
  %s0 = inlined_call_operand.hbm [shape: f32[2,8,32], index: 0, kind: input, shape index: {}]
  %s1 = inlined_call_operand.hbm [shape: f32[32,96], index: 1, kind: input, shape index: {}]
  %s2 = inlined_call_operand.hbm [shape: f32[32,32], index: 2, kind: input, shape index: {}]
  %s3 = inlined_call_operand.vmem [shape: f32[1,96], index: 3, kind: input, shape index: {}]
  %s4 = inlined_call_operand.vmem [shape: f32[1,32], index: 4, kind: input, shape index: {}]
  %s5 = inlined_call_operand.hbm [shape: f32[2,8,32], index: 5, kind: output, shape index: {}]
  %s6 = sld [smem:[#allocation0]]
  $region72: #{tpu_custom_call.1} parent=0
    _
  %s8 = ssub.s32 1, %s6
  %s9 = scalar_select 0, %s8, %s6
  $region1: #{tpu_custom_call.1} parent=0
    #allocation2 [shape = 'u8[8192]{0}', space=vmem, size = 0x2000, scoped, tag = 'input window, operand 0']
    #allocation3 [shape = 's32[2]{0}', space=sflag, size = 0x8, scoped, tag = 'scoped memory for tpu_custom_call.1']
    #allocation4 [shape = 's32[2]{0}', space=sflag, size = 0x8, scoped, tag = 'scoped memory for tpu_custom_call.1']
    #allocation5 [shape = 'u8[16384]{0}', space=vmem, size = 0x4000, scoped, tag = 'input window, operand 1, single buffered']
    #allocation6 [shape = 's32[1]{0}', space=sflag, size = 0x4, scoped, tag = 'scoped memory for tpu_custom_call.1']
    #allocation7 [shape = 'u8[16384]{0}', space=vmem, size = 0x4000, scoped, tag = 'input window, operand 2, single buffered']
    #allocation8 [shape = 'u8[8192]{0}', space=vmem, size = 0x2000, scoped, tag = 'output window, operand 0']
    %10 = vsyncpa [#allocation3], 0
    %s11 = scalar_lea.sflag [#allocation3], 1
    %12 = vsyncpa %s11, 0
    %13 = vsyncpa [#allocation6], 0
    %14 = vsyncpa [#allocation4], 0
    %s15 = scalar_lea.sflag [#allocation4], 1
    %16 = vsyncpa %s15, 0
    loop: start=0, step=1, limit=4
    $region2: #{tpu_custom_call.1} parent=1 // loop_pre_header
      _
    $region3: #{tpu_custom_call.1} parent=1 // loop_header
      %s18 = sphi 0, %s22
      %p19 = scmp.ge.s32.totalorder %s18, 4
      %s28 = sphi 0, %s30
      %s31 = sphi 0, %s28
      %s32 = sphi 0, %s31
      %s48 = sphi 0, %s32
      %s52 = sphi 0, %s52
      %s54 = sphi 0, %s52
      %s55 = sphi 0, %s54
      %s69 = sphi 0, %s55
      %s73 = sphi 0, %s73
      %s75 = sphi 0, %s73
      %s76 = sphi 0, %s75
      %s90 = sphi 0, %s76
      %s94 = sphi 0, %s94
      %s96 = sphi 0, %s94
      %s97 = sphi 0, %s96
      %s111 = sphi 0, %s97
      %s115 = sphi 0, %s115
      %s117 = sphi 0, %s115
      %s118 = sphi 0, %s117
      %s132 = sphi 0, %s118
      %s138 = sphi 0, %s140
      %s141 = sphi 0, %s138
      %s142 = sphi 0, %s141
      %s158 = sphi 0, %s142
    $region4: #{tpu_custom_call.1} parent=1 // loop_header_branch
      %21 = sbr.rel (%p19) target = $region8
    $region5: #{tpu_custom_call.1} parent=1 // loop_body
      %s23 = ssub.s32 %s18, 1
      %s24 = ssub.s32 %s18, 2
      %s25 = sadd.s32 %s18, 1
      %s26 = ssub.s32 %s18, %s25
      %p27 = scmp.eq.s32.totalorder %s26, 0
      %s29 = sadd.s32 %s28, 1
      %s30 = scalar_select %p27, %s28, %s29
      %p33 = pneg %p27
      %p34 = scmp.eq.s32.totalorder %s18, 1
      %p35 = por %p33, %p34
      %p36 = scmp.ne.s32.totalorder %s28, %s31
      %p37 = scmp.eq.s32.totalorder %s18, 0
      %p38 = por %p36, %p37
      %p39 = scmp.ne.s32.totalorder %s28, %s31
      %p40 = scmp.eq.s32.totalorder %s23, 1
      %p41 = por %p39, %p40
      %p42 = scmp.ne.s32.totalorder %s31, %s32
      %p43 = scmp.eq.s32.totalorder %s23, 0
      %p44 = por %p42, %p43
      %p45 = scmp.ne.s32.totalorder %s31, %s32
      %p46 = scmp.eq.s32.totalorder %s24, 1
      %p47 = por %p45, %p46
      %p49 = scmp.ne.s32.totalorder %s32, %s48
      %p50 = scmp.eq.s32.totalorder %s24, 0
      %p51 = por %p49, %p50
      %s53 = sadd.s32 %s52, 1
      %p56 = scmp.eq.s32.totalorder %s18, 1
      %p57 = scmp.ne.s32.totalorder %s52, %s54
      %p58 = scmp.eq.s32.totalorder %s18, 0
      %p59 = por %p57, %p58
      %p60 = scmp.ne.s32.totalorder %s52, %s54
      %p61 = scmp.eq.s32.totalorder %s23, 1
      %p62 = por %p60, %p61
      %p63 = scmp.ne.s32.totalorder %s54, %s55
      %p64 = scmp.eq.s32.totalorder %s23, 0
      %p65 = por %p63, %p64
      %p66 = scmp.ne.s32.totalorder %s54, %s55
      %p67 = scmp.eq.s32.totalorder %s24, 1
      %p68 = por %p66, %p67
      %p70 = scmp.ne.s32.totalorder %s55, %s69
      %p71 = scmp.eq.s32.totalorder %s24, 0
      %p72 = por %p70, %p71
      %s74 = sadd.s32 %s73, 1
      %p77 = scmp.eq.s32.totalorder %s18, 1
      %p78 = scmp.ne.s32.totalorder %s73, %s75
      %p79 = scmp.eq.s32.totalorder %s18, 0
      %p80 = por %p78, %p79
      %p81 = scmp.ne.s32.totalorder %s73, %s75
      %p82 = scmp.eq.s32.totalorder %s23, 1
      %p83 = por %p81, %p82
      %p84 = scmp.ne.s32.totalorder %s75, %s76
      %p85 = scmp.eq.s32.totalorder %s23, 0
      %p86 = por %p84, %p85
      %p87 = scmp.ne.s32.totalorder %s75, %s76
      %p88 = scmp.eq.s32.totalorder %s24, 1
      %p89 = por %p87, %p88
      %p91 = scmp.ne.s32.totalorder %s76, %s90
      %p92 = scmp.eq.s32.totalorder %s24, 0
      %p93 = por %p91, %p92
      %s95 = sadd.s32 %s94, 1
      %p98 = scmp.eq.s32.totalorder %s18, 1
      %p99 = scmp.ne.s32.totalorder %s94, %s96
      %p100 = scmp.eq.s32.totalorder %s18, 0
      %p101 = por %p99, %p100
      %p102 = scmp.ne.s32.totalorder %s94, %s96
      %p103 = scmp.eq.s32.totalorder %s23, 1
      %p104 = por %p102, %p103
      %p105 = scmp.ne.s32.totalorder %s96, %s97
      %p106 = scmp.eq.s32.totalorder %s23, 0
      %p107 = por %p105, %p106
      %p108 = scmp.ne.s32.totalorder %s96, %s97
      %p109 = scmp.eq.s32.totalorder %s24, 1
      %p110 = por %p108, %p109
      %p112 = scmp.ne.s32.totalorder %s97, %s111
      %p113 = scmp.eq.s32.totalorder %s24, 0
      %p114 = por %p112, %p113
      %s116 = sadd.s32 %s115, 1
      %p119 = scmp.eq.s32.totalorder %s18, 1
      %p120 = scmp.ne.s32.totalorder %s115, %s117
      %p121 = scmp.eq.s32.totalorder %s18, 0
      %p122 = por %p120, %p121
      %p123 = scmp.ne.s32.totalorder %s115, %s117
      %p124 = scmp.eq.s32.totalorder %s23, 1
      %p125 = por %p123, %p124
      %p126 = scmp.ne.s32.totalorder %s117, %s118
      %p127 = scmp.eq.s32.totalorder %s23, 0
      %p128 = por %p126, %p127
      %p129 = scmp.ne.s32.totalorder %s117, %s118
      %p130 = scmp.eq.s32.totalorder %s24, 1
      %p131 = por %p129, %p130
      %p133 = scmp.ne.s32.totalorder %s118, %s132
      %p134 = scmp.eq.s32.totalorder %s24, 0
      %p135 = por %p133, %p134
      %s136 = ssub.s32 %s18, %s25
      %p137 = scmp.eq.s32.totalorder %s136, 0
      %s139 = sadd.s32 %s138, 1
      %s140 = scalar_select %p137, %s138, %s139
      %p143 = pneg %p137
      %p144 = scmp.eq.s32.totalorder %s18, 1
      %p145 = por %p143, %p144
      %p146 = scmp.ne.s32.totalorder %s138, %s141
      %p147 = scmp.eq.s32.totalorder %s18, 0
      %p148 = por %p146, %p147
      %p149 = scmp.ne.s32.totalorder %s138, %s141
      %p150 = scmp.eq.s32.totalorder %s23, 1
      %p151 = por %p149, %p150
      %p152 = scmp.ne.s32.totalorder %s141, %s142
      %p153 = scmp.eq.s32.totalorder %s23, 0
      %p154 = por %p152, %p153
      %p155 = scmp.ne.s32.totalorder %s141, %s142
      %p156 = scmp.eq.s32.totalorder %s24, 1
      %p157 = por %p155, %p156
      %p159 = scmp.ne.s32.totalorder %s142, %s158
      %p160 = scmp.eq.s32.totalorder %s24, 0
      %p161 = por %p159, %p160
      %p162 = scmp.le.s32.totalorder 1, %s18
      %p163 = scmp.lt.s32.totalorder %s18, 3
      %p164 = pnand %p162, %p163
      %p165 = pneg %p164
      // Predicated region
      $region9: #{tpu_custom_call.1} parent=5 // pred_check
        _
      $region10: #{tpu_custom_call.1} parent=5 // pred_check_branch
        %167 = sbr.rel (%p164) target = $region12
      $region11: #{tpu_custom_call.1} parent=5 // pred_region
        %s168 = ssub.s32 %s18, 1
        // Predicated region
        $region13: #{tpu_custom_call.1} parent=11 // pred_check
          %p169 = pneg %p65
        $region14: #{tpu_custom_call.1} parent=11 // pred_check_branch
          %171 = sbr.rel (%p169) target = $region16
        $region15: #{tpu_custom_call.1} parent=11 // pred_region
          %173 = vsyncadd [#allocation6], 0
          %s174 = sshll.u32 %s1, 4
          %s175 = int_to_ptr.hbm [resolvable:$true] %s174
          %s176 = sshll.u32 [#allocation5], 4
          %s177 = int_to_ptr.vmem [resolvable:$true] %s176
          %182 = dma.hbm_to_vmem [thread:$0]  %s175, 512, %s177, [#allocation6], 128, 128, 8
        $region16: #{tpu_custom_call.1} parent=11 // pred_fallthru
          _
        // Predicated region
        $region17: #{tpu_custom_call.1} parent=11 // pred_check
          %p183 = pneg %p86
        $region18: #{tpu_custom_call.1} parent=11 // pred_check_branch
          %185 = sbr.rel (%p183) target = $region20
        $region19: #{tpu_custom_call.1} parent=11 // pred_region
          %187 = vsyncadd [#allocation6], 0
          %s188 = sshll.u32 %s2, 4
          %s189 = int_to_ptr.hbm [resolvable:$true] %s188
          %s190 = sshll.u32 [#allocation7], 4
          %s191 = int_to_ptr.vmem [resolvable:$true] %s190
          %196 = dma.hbm_to_vmem [thread:$0]  %s189, 512, %s191, [#allocation6], 128, 128, 8
        $region20: #{tpu_custom_call.1} parent=11 // pred_fallthru
          _
        // Predicated region
        $region21: #{tpu_custom_call.1} parent=11 // pred_check
          %p197 = pneg %p107
        $region22: #{tpu_custom_call.1} parent=11 // pred_check_branch
          %199 = sbr.rel (%p197) target = $region24
        $region23: #{tpu_custom_call.1} parent=11 // pred_region
          _
        $region24: #{tpu_custom_call.1} parent=11 // pred_fallthru
          _
        // Predicated region
        $region25: #{tpu_custom_call.1} parent=11 // pred_check
          %p200 = pneg %p128
        $region26: #{tpu_custom_call.1} parent=11 // pred_check_branch
          %202 = sbr.rel (%p200) target = $region28
        $region27: #{tpu_custom_call.1} parent=11 // pred_region
          _
        $region28: #{tpu_custom_call.1} parent=11 // pred_fallthru
          _
      $region12: #{tpu_custom_call.1} parent=5 // pred_fallthru
        _
      %p203 = scmp.lt.s32.totalorder %s18, 2
      // Predicated region
      $region29: #{tpu_custom_call.1} parent=5 // pred_check
        %p204 = pneg %p203
      $region30: #{tpu_custom_call.1} parent=5 // pred_check_branch
        %206 = sbr.rel (%p204) target = $region32
      $region31: #{tpu_custom_call.1} parent=5 // pred_region
        // Predicated region
        $region33: #{tpu_custom_call.1} parent=31 // pred_check
          %p207 = pneg %p38
        $region34: #{tpu_custom_call.1} parent=31 // pred_check_branch
          %209 = sbr.rel (%p207) target = $region36
        $region35: #{tpu_custom_call.1} parent=31 // pred_region
          %s210 = sand.u32 %s28, 1
          %s211 = scalar_lea.sflag [#allocation3], %s210
          %s212 = sand.u32 %s28, 1
          %s213 = smul.addr %s212, 8
          %s214 = scalar_lea.vmem [#allocation2], %s213
          %216 = vsyncadd %s211, 0
          %s217 = smul.addr %s18, 8
          %s218 = scalar_lea.hbm %s0, %s217
          %s220 = sshll.u32 %s218, 4
          %s221 = int_to_ptr.hbm [resolvable:$true] %s220
          %s222 = sshll.u32 %s214, 4
          %s223 = int_to_ptr.vmem [resolvable:$true] %s222
          %225 = dma.hbm_to_vmem [thread:$0]  %s221, 128, %s223, %s211
        $region36: #{tpu_custom_call.1} parent=31 // pred_fallthru
          _
      $region32: #{tpu_custom_call.1} parent=5 // pred_fallthru
        _
      %p226 = scmp.le.s32.totalorder 1, %s18
      %p227 = scmp.lt.s32.totalorder %s18, 3
      %p228 = pnand %p226, %p227
      %p229 = pneg %p228
      // Predicated region
      $region37: #{tpu_custom_call.1} parent=5 // pred_check
        _
      $region38: #{tpu_custom_call.1} parent=5 // pred_check_branch
        %231 = sbr.rel (%p228) target = $region40
      $region39: #{tpu_custom_call.1} parent=5 // pred_region
        %s232 = ssub.s32 %s18, 1
        %s233 = sand.u32 %s31, 1
        %s234 = scalar_lea.sflag [#allocation3], %s233
        %s235 = sand.u32 %s31, 1
        %s236 = smul.addr %s235, 8
        %s237 = scalar_lea.vmem [#allocation2], %s236
        // Predicated region
        $region41: #{tpu_custom_call.1} parent=39 // pred_check
          %p238 = pneg %p44
        $region42: #{tpu_custom_call.1} parent=39 // pred_check_branch
          %240 = sbr.rel (%p238) target = $region44
        $region43: #{tpu_custom_call.1} parent=39 // pred_region
          %242 = dma.done %s234, 128
        $region44: #{tpu_custom_call.1} parent=39 // pred_fallthru
          _
        // Predicated region
        $region45: #{tpu_custom_call.1} parent=39 // pred_check
          %p243 = pneg %p65
        $region46: #{tpu_custom_call.1} parent=39 // pred_check_branch
          %245 = sbr.rel (%p243) target = $region48
        $region47: #{tpu_custom_call.1} parent=39 // pred_region
          %247 = dma.done [#allocation6], 512
        $region48: #{tpu_custom_call.1} parent=39 // pred_fallthru
          _
        // Predicated region
        $region49: #{tpu_custom_call.1} parent=39 // pred_check
          %p248 = pneg %p86
        $region50: #{tpu_custom_call.1} parent=39 // pred_check_branch
          %250 = sbr.rel (%p248) target = $region52
        $region51: #{tpu_custom_call.1} parent=39 // pred_region
          %252 = dma.done [#allocation6], 512
        $region52: #{tpu_custom_call.1} parent=39 // pred_fallthru
          _
        %s253 = sand.u32 %s31, 1
        %s254 = scalar_lea.sflag [#allocation3], %s253
        %s255 = sand.u32 %s31, 1
        %s256 = smul.addr %s255, 8
        %s257 = scalar_lea.vmem [#allocation2], %s256
        %p258 = pneg %p44
        %p259 = pneg %p41
        %p260 = pneg %p65
        %p261 = pneg %p62
        %p262 = pneg %p86
        %p263 = pneg %p83
        %p264 = pneg %p107
        %p265 = pneg %p104
        %p266 = pneg %p128
        %p267 = pneg %p125
        %p268 = pneg %p154
        %p269 = pneg %p151
        %s270 = sand.u32 %s141, 1
        %s271 = scalar_lea.sflag [#allocation4], %s270
        %s272 = sand.u32 %s141, 1
        %s273 = smul.addr %s272, 8
        %s274 = scalar_lea.vmem [#allocation8], %s273
        %v275 = vld [vmem:[#allocation5] sm:$0xff]
        %v276 = vld [vmem:[#allocation5 + $0x8] sm:$0xff]
        %v277 = vld [vmem:[#allocation5 + $0x10] sm:$0xff]
        %v278 = vld [vmem:[#allocation5 + $0x18] sm:$0xff]
        %v279 = vld [vmem:[#allocation7] sm:$0xff]
        %v280 = vld [vmem:[#allocation7 + $0x8] sm:$0xff]
        %v281 = vld [vmem:[#allocation7 + $0x10] sm:$0xff]
        %v282 = vld [vmem:[#allocation7 + $0x18] sm:$0xff]
        %v283 = vld [vmem:[%s3] sm:$0x1]
        %v284 = vld [vmem:[%s4] sm:$0x1]
        %v285 = vld [vmem:[%s237] sm:$0xff]
        loop: start=0, step=1, limit=6
        $region53: #{tpu_custom_call.1} parent=39 // loop_pre_header
          _
        $region54: #{tpu_custom_call.1} parent=39 // loop_header
          %s287 = sphi 0, %s291
          %p288 = scmp.ge.s32.totalorder %s287, 6
          %v292 = vphi %v285, %v661
        $region55: #{tpu_custom_call.1} parent=39 // loop_header_branch
          %290 = sbr.rel (%p288) target = $region59
        $region56: #{tpu_custom_call.1} parent=39 // loop_body
          %v294 = vperm.slane %v283, 0
          %vm296 = vcmask 261120
          %v298 = vsel %vm296, %v292, 0
          %300 = vmatpush.msra.mxu0 0.0
          %301 = vmatpush.msra.mxu0 0.0
          %302 = vmatpush.msra.mxu0 0.0
          %303 = vmatpush.msra.mxu0 0.0
          %304 = vmatpush.msra.mxu0 0.0
          %305 = vmatpush.msra.mxu0 0.0
          %306 = vmatpush.msra.mxu0 0.0
          %307 = vmatpush.msra.mxu0 0.0
          %308 = vmatpush.msra.mxu0 0.0
          %309 = vmatpush.msra.mxu0 0.0
          %310 = vmatpush.msra.mxu0 0.0
          %311 = vmatpush.msra.mxu0 0.0
          %312 = vmatpush.msra.mxu0 %v278
          %313 = vmatpush.msra.mxu0 %v277
          %314 = vmatpush.msra.mxu0 %v276
          %315 = vmatpush.msra.mxu0 %v275
          %316 = vmatmul.f32.gmra.mxu0 %v298
          %v317 = vpop.f32.mrf.mxu0
          %v318 = vadd.f32 %v294, %v317
          %319 = vdwg.mxu0
          %321 = vrot.lane.b32.xlu0 %v318, 96
          %v322 = vpop.permute.xlu0 %321
          %vm323 = vcmask 64512
          %v324 = vsel %vm323, %v318, 0
          %v326 = vsel %vm323, %v322, 0
          %328 = vmatpush.xpose.msra.mxu0 0.0
          %329 = vmatpush.xpose.msra.mxu0 0.0
          %330 = vmatpush.xpose.msra.mxu0 0.0
          %331 = vmatpush.xpose.msra.mxu0 0.0
          %332 = vmatpush.xpose.msra.mxu0 0.0
          %333 = vmatpush.xpose.msra.mxu0 0.0
          %334 = vmatpush.xpose.msra.mxu0 0.0
          %335 = vmatpush.xpose.msra.mxu0 0.0
          %336 = vmatpush.xpose.msra.mxu0 0.0
          %337 = vmatpush.xpose.msra.mxu0 0.0
          %338 = vmatpush.xpose.msra.mxu0 0.0
          %339 = vmatpush.xpose.msra.mxu0 0.0
          %340 = vmatpush.xpose.msra.mxu0 0.0
          %341 = vmatpush.xpose.msra.mxu0 0.0
          %342 = vmatpush.xpose.msra.mxu0 0.0
          %343 = vmatpush.xpose.msra.mxu0 %v326
          %344 = vmatmul.f32.gmra.mxu0 %v324
          %v345 = vpop.f32.mrf.mxu0
          %v346 = vadd.f32 0.0, %v345
          %347 = vdwg.mxu0
          %v348 = vsel %vm323, %v346, -inf
          %349 = vmax.xlane.f32.xlu0 %v348
          %v350 = vpop.xlane.xlu0 %349
          %v351 = vsub.f32 %v346, %v350
          %v352 = vmul.f32 %v351, 1.442695
          %v353 = vpow.pop %v352
          %v354 = vsel %vm323, %v353, 0.0
          %355 = vadd.xlane.f32.xlu0 %v354
          %v356 = vpop.xlane.xlu0 %355
          %v357 = vrcp.pop %v356
          %v358 = vmul.f32 %v353, %v357
          %359 = vrot.lane.b32.xlu0 %v318, 64
          %v360 = vpop.permute.xlu0 %359
          %v363 = vsel %vm323, %v358, 0
          %365 = vmatpush.msra.mxu0 0.0
          %366 = vmatpush.msra.mxu0 0.0
          %367 = vmatpush.msra.mxu0 0.0
          %368 = vmatpush.msra.mxu0 0.0
          %369 = vmatpush.msra.mxu0 0.0
          %370 = vmatpush.msra.mxu0 0.0
          %371 = vmatpush.msra.mxu0 0.0
          %372 = vmatpush.msra.mxu0 0.0
          %373 = vmatpush.msra.mxu0 0.0
          %374 = vmatpush.msra.mxu0 0.0
          %375 = vmatpush.msra.mxu0 0.0
          %376 = vmatpush.msra.mxu0 0.0
          %377 = vmatpush.msra.mxu0 0.0
          %378 = vmatpush.msra.mxu0 0.0
          %379 = vmatpush.msra.mxu0 0.0
          %380 = vmatpush.msra.mxu0 %v360
          %381 = vmatmul.f32.gmra.mxu0 %v363
          %v382 = vpop.f32.mrf.mxu0
          %v383 = vadd.f32 0.0, %v382
          %384 = vdwg.mxu0
          %385 = vrot.lane.b32.xlu0 %v318, 120
          %v386 = vpop.permute.xlu0 %385
          %387 = vrot.lane.b32.xlu0 %v318, 88
          %v388 = vpop.permute.xlu0 %387
          %v389 = vsel %vm323, %v386, 0
          %v391 = vsel %vm323, %v388, 0
          %393 = vmatpush.xpose.msra.mxu0 0.0
          %394 = vmatpush.xpose.msra.mxu0 0.0
          %395 = vmatpush.xpose.msra.mxu0 0.0
          %396 = vmatpush.xpose.msra.mxu0 0.0
          %397 = vmatpush.xpose.msra.mxu0 0.0
          %398 = vmatpush.xpose.msra.mxu0 0.0
          %399 = vmatpush.xpose.msra.mxu0 0.0
          %400 = vmatpush.xpose.msra.mxu0 0.0
          %401 = vmatpush.xpose.msra.mxu0 0.0
          %402 = vmatpush.xpose.msra.mxu0 0.0
          %403 = vmatpush.xpose.msra.mxu0 0.0
          %404 = vmatpush.xpose.msra.mxu0 0.0
          %405 = vmatpush.xpose.msra.mxu0 0.0
          %406 = vmatpush.xpose.msra.mxu0 0.0
          %407 = vmatpush.xpose.msra.mxu0 0.0
          %408 = vmatpush.xpose.msra.mxu0 %v391
          %409 = vmatmul.f32.gmra.mxu0 %v389
          %v410 = vpop.f32.mrf.mxu0
          %v411 = vadd.f32 0.0, %v410
          %412 = vdwg.mxu0
          %v413 = vsel %vm323, %v411, -inf
          %414 = vmax.xlane.f32.xlu0 %v413
          %v415 = vpop.xlane.xlu0 %414
          %v416 = vsub.f32 %v411, %v415
          %v417 = vmul.f32 %v416, 1.442695
          %v418 = vpow.pop %v417
          %v419 = vsel %vm323, %v418, 0.0
          %420 = vadd.xlane.f32.xlu0 %v419
          %v421 = vpop.xlane.xlu0 %420
          %v422 = vrcp.pop %v421
          %v423 = vmul.f32 %v418, %v422
          %424 = vrot.lane.b32.xlu0 %v318, 56
          %v425 = vpop.permute.xlu0 %424
          %v428 = vsel %vm323, %v423, 0
          %430 = vmatpush.msra.mxu0 0.0
          %431 = vmatpush.msra.mxu0 0.0
          %432 = vmatpush.msra.mxu0 0.0
          %433 = vmatpush.msra.mxu0 0.0
          %434 = vmatpush.msra.mxu0 0.0
          %435 = vmatpush.msra.mxu0 0.0
          %436 = vmatpush.msra.mxu0 0.0
          %437 = vmatpush.msra.mxu0 0.0
          %438 = vmatpush.msra.mxu0 0.0
          %439 = vmatpush.msra.mxu0 0.0
          %440 = vmatpush.msra.mxu0 0.0
          %441 = vmatpush.msra.mxu0 0.0
          %442 = vmatpush.msra.mxu0 0.0
          %443 = vmatpush.msra.mxu0 0.0
          %444 = vmatpush.msra.mxu0 0.0
          %445 = vmatpush.msra.mxu0 %v425
          %446 = vmatmul.f32.gmra.mxu0 %v428
          %v447 = vpop.f32.mrf.mxu0
          %v448 = vadd.f32 0.0, %v447
          %449 = vdwg.mxu0
          %450 = vrot.lane.b32.xlu0 %v318, 112
          %v451 = vpop.permute.xlu0 %450
          %452 = vrot.lane.b32.xlu0 %v318, 80
          %v453 = vpop.permute.xlu0 %452
          %v454 = vsel %vm323, %v451, 0
          %v456 = vsel %vm323, %v453, 0
          %458 = vmatpush.xpose.msra.mxu0 0.0
          %459 = vmatpush.xpose.msra.mxu0 0.0
          %460 = vmatpush.xpose.msra.mxu0 0.0
          %461 = vmatpush.xpose.msra.mxu0 0.0
          %462 = vmatpush.xpose.msra.mxu0 0.0
          %463 = vmatpush.xpose.msra.mxu0 0.0
          %464 = vmatpush.xpose.msra.mxu0 0.0
          %465 = vmatpush.xpose.msra.mxu0 0.0
          %466 = vmatpush.xpose.msra.mxu0 0.0
          %467 = vmatpush.xpose.msra.mxu0 0.0
          %468 = vmatpush.xpose.msra.mxu0 0.0
          %469 = vmatpush.xpose.msra.mxu0 0.0
          %470 = vmatpush.xpose.msra.mxu0 0.0
          %471 = vmatpush.xpose.msra.mxu0 0.0
          %472 = vmatpush.xpose.msra.mxu0 0.0
          %473 = vmatpush.xpose.msra.mxu0 %v456
          %474 = vmatmul.f32.gmra.mxu0 %v454
          %v475 = vpop.f32.mrf.mxu0
          %v476 = vadd.f32 0.0, %v475
          %477 = vdwg.mxu0
          %v478 = vsel %vm323, %v476, -inf
          %479 = vmax.xlane.f32.xlu0 %v478
          %v480 = vpop.xlane.xlu0 %479
          %v481 = vsub.f32 %v476, %v480
          %v482 = vmul.f32 %v481, 1.442695
          %v483 = vpow.pop %v482
          %v484 = vsel %vm323, %v483, 0.0
          %485 = vadd.xlane.f32.xlu0 %v484
          %v486 = vpop.xlane.xlu0 %485
          %v487 = vrcp.pop %v486
          %v488 = vmul.f32 %v483, %v487
          %489 = vrot.lane.b32.xlu0 %v318, 48
          %v490 = vpop.permute.xlu0 %489
          %v493 = vsel %vm323, %v488, 0
          %495 = vmatpush.msra.mxu0 0.0
          %496 = vmatpush.msra.mxu0 0.0
          %497 = vmatpush.msra.mxu0 0.0
          %498 = vmatpush.msra.mxu0 0.0
          %499 = vmatpush.msra.mxu0 0.0
          %500 = vmatpush.msra.mxu0 0.0
          %501 = vmatpush.msra.mxu0 0.0
          %502 = vmatpush.msra.mxu0 0.0
          %503 = vmatpush.msra.mxu0 0.0
          %504 = vmatpush.msra.mxu0 0.0
          %505 = vmatpush.msra.mxu0 0.0
          %506 = vmatpush.msra.mxu0 0.0
          %507 = vmatpush.msra.mxu0 0.0
          %508 = vmatpush.msra.mxu0 0.0
          %509 = vmatpush.msra.mxu0 0.0
          %510 = vmatpush.msra.mxu0 %v490
          %511 = vmatmul.f32.gmra.mxu0 %v493
          %v512 = vpop.f32.mrf.mxu0
          %v513 = vadd.f32 0.0, %v512
          %514 = vdwg.mxu0
          %515 = vrot.lane.b32.xlu0 %v318, 104
          %v516 = vpop.permute.xlu0 %515
          %517 = vrot.lane.b32.xlu0 %v318, 72
          %v518 = vpop.permute.xlu0 %517
          %v519 = vsel %vm323, %v516, 0
          %v521 = vsel %vm323, %v518, 0
          %523 = vmatpush.xpose.msra.mxu0 0.0
          %524 = vmatpush.xpose.msra.mxu0 0.0
          %525 = vmatpush.xpose.msra.mxu0 0.0
          %526 = vmatpush.xpose.msra.mxu0 0.0
          %527 = vmatpush.xpose.msra.mxu0 0.0
          %528 = vmatpush.xpose.msra.mxu0 0.0
          %529 = vmatpush.xpose.msra.mxu0 0.0
          %530 = vmatpush.xpose.msra.mxu0 0.0
          %531 = vmatpush.xpose.msra.mxu0 0.0
          %532 = vmatpush.xpose.msra.mxu0 0.0
          %533 = vmatpush.xpose.msra.mxu0 0.0
          %534 = vmatpush.xpose.msra.mxu0 0.0
          %535 = vmatpush.xpose.msra.mxu0 0.0
          %536 = vmatpush.xpose.msra.mxu0 0.0
          %537 = vmatpush.xpose.msra.mxu0 0.0
          %538 = vmatpush.xpose.msra.mxu0 %v521
          %539 = vmatmul.f32.gmra.mxu0 %v519
          %v540 = vpop.f32.mrf.mxu0
          %v541 = vadd.f32 0.0, %v540
          %542 = vdwg.mxu0
          %v543 = vsel %vm323, %v541, -inf
          %544 = vmax.xlane.f32.xlu0 %v543
          %v545 = vpop.xlane.xlu0 %544
          %v546 = vsub.f32 %v541, %v545
          %v547 = vmul.f32 %v546, 1.442695
          %v548 = vpow.pop %v547
          %v549 = vsel %vm323, %v548, 0.0
          %550 = vadd.xlane.f32.xlu0 %v549
          %v551 = vpop.xlane.xlu0 %550
          %v552 = vrcp.pop %v551
          %v553 = vmul.f32 %v548, %v552
          %554 = vrot.lane.b32.xlu0 %v318, 40
          %v555 = vpop.permute.xlu0 %554
          %v558 = vsel %vm323, %v553, 0
          %560 = vmatpush.msra.mxu0 0.0
          %561 = vmatpush.msra.mxu0 0.0
          %562 = vmatpush.msra.mxu0 0.0
          %563 = vmatpush.msra.mxu0 0.0
          %564 = vmatpush.msra.mxu0 0.0
          %565 = vmatpush.msra.mxu0 0.0
          %566 = vmatpush.msra.mxu0 0.0
          %567 = vmatpush.msra.mxu0 0.0
          %568 = vmatpush.msra.mxu0 0.0
          %569 = vmatpush.msra.mxu0 0.0
          %570 = vmatpush.msra.mxu0 0.0
          %571 = vmatpush.msra.mxu0 0.0
          %572 = vmatpush.msra.mxu0 0.0
          %573 = vmatpush.msra.mxu0 0.0
          %574 = vmatpush.msra.mxu0 0.0
          %575 = vmatpush.msra.mxu0 %v555
          %576 = vmatmul.f32.gmra.mxu0 %v558
          %v577 = vpop.f32.mrf.mxu0
          %v578 = vadd.f32 0.0, %v577
          %579 = vdwg.mxu0
          %581 = vrot.lane.b32.xlu0 %v448, 8
          %v582 = vpop.permute.xlu0 %581
          %585 = vrot.lane.b32.xlu0 %v513, 16
          %v586 = vpop.permute.xlu0 %585
          %589 = vrot.lane.b32.xlu0 %v578, 24
          %v590 = vpop.permute.xlu0 %589
          %v592 = vsel %vm323, %v383, %v582
          %vm593 = vcmask 130048
          %v594 = vsel %vm593, %v592, %v586
          %vm595 = vcmask 195584
          %v596 = vsel %vm595, %v594, %v590
          %v598 = vperm.slane %v284, 0
          %v601 = vsel %vm296, %v596, 0
          %603 = vmatpush.msra.mxu0 0.0
          %604 = vmatpush.msra.mxu0 0.0
          %605 = vmatpush.msra.mxu0 0.0
          %606 = vmatpush.msra.mxu0 0.0
          %607 = vmatpush.msra.mxu0 0.0
          %608 = vmatpush.msra.mxu0 0.0
          %609 = vmatpush.msra.mxu0 0.0
          %610 = vmatpush.msra.mxu0 0.0
          %611 = vmatpush.msra.mxu0 0.0
          %612 = vmatpush.msra.mxu0 0.0
          %613 = vmatpush.msra.mxu0 0.0
          %614 = vmatpush.msra.mxu0 0.0
          %615 = vmatpush.msra.mxu0 %v282
          %616 = vmatpush.msra.mxu0 %v281
          %617 = vmatpush.msra.mxu0 %v280
          %618 = vmatpush.msra.mxu0 %v279
          %619 = vmatmul.f32.gmra.mxu0 %v601
          %v620 = vpop.f32.mrf.mxu0
          %v621 = vadd.f32 %v598, %v620
          %622 = vdwg.mxu0
          %v623 = vadd.f32 %v292, %v621
          %v624 = vsel %vm296, %v623, 0.0
          %v625 = vrot.slane %v624, 4
          %v626 = vadd.f32 %v624, %v625
          %v627 = vrot.slane %v626, 2
          %v628 = vadd.f32 %v626, %v627
          %v629 = vrot.slane %v628, 1
          %v630 = vadd.f32 %v628, %v629
          %v631 = vrcp.pop 8.0
          %v632 = vmul.f32 8.0, %v631
          %v633 = vsub.f32 1.0, %v632
          %v634 = vmul.f32 %v631, %v633
          %v635 = vadd.f32 %v631, %v634
          %vm636 = vweird.f32 %v631
          %v637 = vsel %vm636, %v631, %v635
          %v638 = vmul.f32 %v630, %v637
          %v639 = vsub.f32 %v623, %v638
          %v640 = vmul.f32 %v639, %v639
          %v641 = vsel %vm296, %v640, 0.0
          %v642 = vrot.slane %v641, 4
          %v643 = vadd.f32 %v641, %v642
          %v644 = vrot.slane %v643, 2
          %v645 = vadd.f32 %v643, %v644
          %v646 = vrot.slane %v645, 1
          %v647 = vadd.f32 %v645, %v646
          %v648 = vmul.f32 %v647, %v637
          %v649 = vadd.f32 %v648, 1e-05
          %v650 = vrsqrt.pop %v649
          %v651 = vmul.f32 %v650, %v649
          %v652 = vmul.f32 %v651, %v650
          %v653 = vmul.f32 0.5, %v652
          %v654 = vsub.f32 1.5, %v653
          %v655 = vmul.f32 %v650, %v654
          %vm656 = vweird.f32 %v649
          %vm657 = vweird.f32 %v650
          %vm658 = vmor %vm656, %vm657
          %v659 = vsel %vm658, %v650, %v655
          %v660 = vmul.f32 %v639, %v659
          %v661 = vmax.f32 %v660, 0.0
        $region57: #{tpu_custom_call.1} parent=39 // loop_footer
          %s291 = sadd.s32 1, %s287
        $region58: #{tpu_custom_call.1} parent=39 // loop_footer_branch
          %286 = sbr.rel target = $region54
        $region59: #{tpu_custom_call.1} parent=39 // loop_exit
          _
        %vm662 = vcmask 261120
        %663 = vst.msk [vmem:[%s274] sm:$0xff] %vm662, %v292
        %s664 = sand.u32 %s141, 1
        %s665 = scalar_lea.sflag [#allocation4], %s664
        %s666 = sand.u32 %s141, 1
        %s667 = smul.addr %s666, 8
        %s668 = scalar_lea.vmem [#allocation8], %s667
        // Predicated region
        $region60: #{tpu_custom_call.1} parent=39 // pred_check
          %p669 = pneg %p151
        $region61: #{tpu_custom_call.1} parent=39 // pred_check_branch
          %671 = sbr.rel (%p669) target = $region63
        $region62: #{tpu_custom_call.1} parent=39 // pred_region
          %673 = vsyncadd %s665, 0
          %s674 = smul.addr %s23, 8
          %s675 = scalar_lea.hbm %s5, %s674
          %s677 = sshll.u32 %s668, 4
          %s678 = int_to_ptr.vmem [resolvable:$true] %s677
          %s679 = sshll.u32 %s675, 4
          %s680 = int_to_ptr.hbm [resolvable:$true] %s679
          %682 = dma.vmem_to_hbm [thread:$0]  %s678, 128, %s680, %s665
        $region63: #{tpu_custom_call.1} parent=39 // pred_fallthru
          _
      $region40: #{tpu_custom_call.1} parent=5 // pred_fallthru
        _
      %p683 = scmp.le.s32.totalorder 2, %s18
      // Predicated region
      $region64: #{tpu_custom_call.1} parent=5 // pred_check
        %p684 = pneg %p683
      $region65: #{tpu_custom_call.1} parent=5 // pred_check_branch
        %686 = sbr.rel (%p684) target = $region67
      $region66: #{tpu_custom_call.1} parent=5 // pred_region
        %s687 = ssub.s32 %s18, 2
        // Predicated region
        $region68: #{tpu_custom_call.1} parent=66 // pred_check
          %p688 = pneg %p157
        $region69: #{tpu_custom_call.1} parent=66 // pred_check_branch
          %690 = sbr.rel (%p688) target = $region71
        $region70: #{tpu_custom_call.1} parent=66 // pred_region
          %s691 = sand.u32 %s142, 1
          %s692 = scalar_lea.sflag [#allocation4], %s691
          %s693 = sand.u32 %s142, 1
          %s694 = smul.addr %s693, 8
          %s695 = scalar_lea.vmem [#allocation8], %s694
          %697 = dma.done %s692, 128
        $region71: #{tpu_custom_call.1} parent=66 // pred_fallthru
          _
      $region67: #{tpu_custom_call.1} parent=5 // pred_fallthru
        _
    $region6: #{tpu_custom_call.1} parent=1 // loop_footer
      %s22 = sadd.s32 1, %s18
    $region7: #{tpu_custom_call.1} parent=1 // loop_footer_branch
      %17 = sbr.rel target = $region3
    $region8: #{tpu_custom_call.1} parent=1 // loop_exit
      _
    %698 = vsyncpa [#allocation3], 1
    %s699 = scalar_lea.sflag [#allocation3], 1
    %700 = vsyncpa %s699, 1
    %701 = vsyncpa [#allocation6], 1
    %702 = vsyncpa [#allocation4], 1
    %s703 = scalar_lea.sflag [#allocation4], 1
    %704 = vsyncpa %s703, 1

</llo_original>
